<compile_context>
chip_gen: v7x
topology: tpu7x:2x2x1
jax: 0.10.0
libtpu: 0.0.40
codegen_flags: <defaults>
</compile_context>

<pallas_src>
import jax
import jax.numpy as jnp
from jax.experimental import pallas as pl
from jax.experimental.pallas import tpu as pltpu

IN_FEATURES = 28 * 28      # 784 (kept unpadded; full-array last dim is legal)
HIDDEN = 128
OUT_FEATURES = 10
OUT_PAD = 128              # lane-dense output block


def _round_up(v, m):
    return ((v + m - 1) // m) * m


def mlp_kernel(x_ref, w1_ref, b1_ref, w2_ref, b2_ref, o_ref):
    # x tile: (TB, 784) in its HBM dtype; cast to bf16 in-kernel (VPU, cheap,
    # and we're HBM-bound anyway). Weights are resident in VMEM across the grid.
    x = x_ref[...].astype(jnp.bfloat16)
    h = jnp.dot(x, w1_ref[...],
                preferred_element_type=jnp.float32)       # (TB, 128) f32 acc
    h = jnp.maximum(h + b1_ref[...], 0.0)                 # bias + ReLU in f32
    y = jnp.dot(h.astype(jnp.bfloat16), w2_ref[...],
                preferred_element_type=jnp.float32)       # (TB, 128) f32 acc
    o_ref[...] = (y + b2_ref[...]).astype(o_ref.dtype)    # bf16 writeback


def prepare_params(w1, b1, w2, b2):
    """Cast/pad params once (outside the kernel).

    w1: (784, 128) f32, b1: (128,) f32, w2: (128, 10) f32, b2: (10,) f32
    """
    w1p = w1.astype(jnp.bfloat16)                                        # (784, 128)
    b1p = b1.reshape(1, HIDDEN).astype(jnp.float32)                      # (1, 128)
    w2p = jnp.pad(w2, ((0, 0), (0, OUT_PAD - OUT_FEATURES))).astype(jnp.bfloat16)
    b2p = jnp.pad(b2, (0, OUT_PAD - OUT_FEATURES)).reshape(1, OUT_PAD).astype(jnp.float32)
    return w1p, b1p, w2p, b2p


def net_forward(x, params, out_dtype=jnp.float32):
    """x: (B, 784) f32 or bf16 -> (B, 10) out_dtype."""
    w1p, b1p, w2p, b2p = params
    B, F = x.shape
    assert F == IN_FEATURES

    # Batch tile selection:
    #  * cap tile so double-buffered x (+ resident weights + out) stays under
    #    the default 16 MiB scoped VMEM even on v5e (f32 input -> 1024 rows),
    #  * derive TB from B so batch padding waste is < 8 rows per tile,
    #  * keep >= 2 grid steps when possible so v7x's two TensorCores both work.
    tb_max = 2048 if x.dtype == jnp.bfloat16 else 1024
    n_tiles = max(1, pl.cdiv(B, tb_max))
    if n_tiles == 1 and B >= 16:
        n_tiles = 2
    TB = _round_up(pl.cdiv(B, n_tiles), 8)
    B_pad = TB * n_tiles
    if B_pad != B:
        x = jnp.pad(x, ((0, B_pad - B), (0, 0)))   # batch rows only; cheap
    grid = (n_tiles,)

    flops = 2 * B_pad * IN_FEATURES * HIDDEN + 2 * B_pad * HIDDEN * OUT_PAD
    bytes_accessed = (B_pad * IN_FEATURES * x.dtype.itemsize
                      + w1p.size * 2 + w2p.size * 2
                      + b1p.size * 4 + b2p.size * 4
                      + B_pad * OUT_PAD * 2)
    cost = pl.CostEstimate(flops=flops, transcendentals=0,
                           bytes_accessed=bytes_accessed)

    out = pl.pallas_call(
        mlp_kernel,
        out_shape=jax.ShapeDtypeStruct((B_pad, OUT_PAD), jnp.bfloat16),
        grid=grid,
        in_specs=[
            pl.BlockSpec((TB, IN_FEATURES), lambda i: (i, 0)),        # x tile
            pl.BlockSpec((IN_FEATURES, HIDDEN), lambda i: (0, 0)),    # W1 (resident)
            pl.BlockSpec((1, HIDDEN), lambda i: (0, 0)),              # b1 (resident)
            pl.BlockSpec((HIDDEN, OUT_PAD), lambda i: (0, 0)),        # W2 (resident)
            pl.BlockSpec((1, OUT_PAD), lambda i: (0, 0)),             # b2 (resident)
        ],
        out_specs=pl.BlockSpec((TB, OUT_PAD), lambda i: (i, 0)),
        compiler_params=pltpu.CompilerParams(
            dimension_semantics=("parallel",)),
        cost_estimate=cost,
    )(x, w1p, b1p, w2p, b2p)

    # Under jit this slice+cast fuses into the consumer; kept here for a clean API.
    return out[:B, :OUT_FEATURES].astype(out_dtype)


def init_params(key):
    """Deterministic params matching nn.Linear(784,128)/nn.Linear(128,10)
    default init scale; stored as (in, out) for the x @ W layout."""
    k1, k2, k3, k4 = jax.random.split(key, 4)
    bound1 = 1.0 / jnp.sqrt(784.0)
    bound2 = 1.0 / jnp.sqrt(128.0)
    w1 = jax.random.uniform(k1, (IN_FEATURES, HIDDEN), jnp.float32, -bound1, bound1)
    b1 = jax.random.uniform(k2, (HIDDEN,), jnp.float32, -bound1, bound1)
    w2 = jax.random.uniform(k3, (HIDDEN, OUT_FEATURES), jnp.float32, -bound2, bound2)
    b2 = jax.random.uniform(k4, (OUT_FEATURES,), jnp.float32, -bound2, bound2)
    return w1, b1, w2, b2


if __name__ == "__main__":
    key = jax.random.PRNGKey(0)
    k_x, k_p = jax.random.split(key)

    B = 16  # small demo batch; >= 16 exercises the 2-tile grid / megacore path
    x = jax.random.normal(k_x, (B, IN_FEATURES), jnp.float32)
    w1, b1, w2, b2 = init_params(k_p)
    params = prepare_params(w1, b1, w2, b2)

    out = net_forward(x, params)
    out = jax.block_until_ready(out)
    assert out.shape == (B, OUT_FEATURES)
    assert out.dtype == jnp.float32

    # Precision-matched reference (same bf16 casts, f32 accumulation,
    # bf16 output writeback).
    x_bf = x.astype(jnp.bfloat16).astype(jnp.float32)
    w1_bf = w1.astype(jnp.bfloat16).astype(jnp.float32)
    w2_bf = w2.astype(jnp.bfloat16).astype(jnp.float32)
    h_ref = jnp.maximum(x_bf @ w1_bf + b1, 0.0)
    ref = h_ref.astype(jnp.bfloat16).astype(jnp.float32) @ w2_bf + b2
    ref = ref.astype(jnp.bfloat16).astype(jnp.float32)
    assert jnp.allclose(out, ref, atol=2e-2, rtol=2e-2)

    # Loose sanity check against the pure-f32 math.
    ref_f32 = jnp.maximum(x @ w1 + b1, 0.0) @ w2 + b2
    assert jnp.allclose(out, ref_f32, atol=6e-2, rtol=6e-2)

    print("KERNEL_OK")
</pallas_src>

<mosaic_0001>
module attributes {stable_mosaic.version = 11 : i64} {
  func.func @mlp_kernel(%arg0: i32, %arg1: memref<8x784xf32, #tpu.memory_space<vmem>>, %arg2: memref<784x128xbf16, #tpu.memory_space<vmem>>, %arg3: memref<1x128xf32, #tpu.memory_space<vmem>>, %arg4: memref<128x128xbf16, #tpu.memory_space<vmem>>, %arg5: memref<1x128xf32, #tpu.memory_space<vmem>>, %arg6: memref<8x128xbf16, #tpu.memory_space<vmem>>) attributes {dimension_semantics = [#tpu.dimension_semantics<parallel>], iteration_bounds = array<i64: 2>, scalar_prefetch = 0 : i64, scratch_operands = 0 : i64, tpu.core_type = #tpu.core_type<tc>, window_params = [{transform_indices = @transform_0, window_bounds = array<i64: 8, 784>}, {pipeline_mode = #tpu.pipeline_mode<synchronous>, transform_indices = @transform_1, window_bounds = array<i64: 784, 128>}, {pipeline_mode = #tpu.pipeline_mode<synchronous>, transform_indices = @transform_2, window_bounds = array<i64: 1, 128>}, {pipeline_mode = #tpu.pipeline_mode<synchronous>, transform_indices = @transform_3, window_bounds = array<i64: 128, 128>}, {pipeline_mode = #tpu.pipeline_mode<synchronous>, transform_indices = @transform_4, window_bounds = array<i64: 1, 128>}, {transform_indices = @transform_5, window_bounds = array<i64: 8, 128>}]} {
    %c0 = arith.constant 0 : index
    %c0_0 = arith.constant 0 : index
    %0 = vector.load %arg1[%c0, %c0_0] : memref<8x784xf32, #tpu.memory_space<vmem>>, vector<8x784xf32>
    %1 = arith.truncf %0 : vector<8x784xf32> to vector<8x784xbf16>
    %c0_1 = arith.constant 0 : index
    %c0_2 = arith.constant 0 : index
    %2 = vector.load %arg2[%c0_1, %c0_2] : memref<784x128xbf16, #tpu.memory_space<vmem>>, vector<784x128xbf16>
    %cst = arith.constant dense<0.000000e+00> : vector<8x128xf32>
    %3 = tpu.matmul %1, %2, %cst {dimension_numbers = #tpu.dot_dimension_numbers<[1], [0], [0], [1], [0, 0, 1, 1], [], []>} : vector<8x784xbf16>, vector<784x128xbf16>, vector<8x128xf32> -> vector<8x128xf32>
    %c0_3 = arith.constant 0 : index
    %c0_4 = arith.constant 0 : index
    %4 = vector.load %arg3[%c0_3, %c0_4] : memref<1x128xf32, #tpu.memory_space<vmem>>, vector<1x128xf32>
    %5 = vector.broadcast %4 : vector<1x128xf32> to vector<8x128xf32>
    %6 = arith.addf %3, %5 : vector<8x128xf32>
    %cst_5 = arith.constant 0.000000e+00 : f32
    %7 = vector.broadcast %cst_5 : f32 to vector<8x128xf32>
    %8 = arith.maximumf %6, %7 : vector<8x128xf32>
    %9 = arith.truncf %8 : vector<8x128xf32> to vector<8x128xbf16>
    %c0_6 = arith.constant 0 : index
    %c0_7 = arith.constant 0 : index
    %10 = vector.load %arg4[%c0_6, %c0_7] : memref<128x128xbf16, #tpu.memory_space<vmem>>, vector<128x128xbf16>
    %cst_8 = arith.constant dense<0.000000e+00> : vector<8x128xf32>
    %11 = tpu.matmul %9, %10, %cst_8 {dimension_numbers = #tpu.dot_dimension_numbers<[1], [0], [0], [1], [0, 0, 1, 1], [], []>} : vector<8x128xbf16>, vector<128x128xbf16>, vector<8x128xf32> -> vector<8x128xf32>
    %c0_9 = arith.constant 0 : index
    %c0_10 = arith.constant 0 : index
    %12 = vector.load %arg5[%c0_9, %c0_10] : memref<1x128xf32, #tpu.memory_space<vmem>>, vector<1x128xf32>
    %13 = vector.broadcast %12 : vector<1x128xf32> to vector<8x128xf32>
    %14 = arith.addf %11, %13 : vector<8x128xf32>
    %15 = arith.truncf %14 : vector<8x128xf32> to vector<8x128xbf16>
    %c0_11 = arith.constant 0 : index
    %c0_12 = arith.constant 0 : index
    %16 = vector.load %arg6[%c0_11, %c0_12] : memref<8x128xbf16, #tpu.memory_space<vmem>>, vector<8x128xbf16>
    tpu.vector_store %arg6[%c0_11, %c0_12], %15 {strides = array<i32>} : memref<8x128xbf16, #tpu.memory_space<vmem>>, vector<8x128xbf16>,
    return
  }
  func.func @transform_0(%arg0: i32) -> (i32, i32) {
    %c0_i32 = arith.constant 0 : i32
    %c0_i32_0 = arith.constant 0 : i32
    return %arg0, %c0_i32 : i32, i32
  }
  func.func @transform_1(%arg0: i32) -> (i32, i32) {
    %c0_i32 = arith.constant 0 : i32
    %c0_i32_0 = arith.constant 0 : i32
    %c0_i32_1 = arith.constant 0 : i32
    return %c0_i32, %c0_i32_0 : i32, i32
  }
  func.func @transform_2(%arg0: i32) -> (i32, i32) {
    %c0_i32 = arith.constant 0 : i32
    %c0_i32_0 = arith.constant 0 : i32
    %c0_i32_1 = arith.constant 0 : i32
    return %c0_i32, %c0_i32_0 : i32, i32
  }
  func.func @transform_3(%arg0: i32) -> (i32, i32) {
    %c0_i32 = arith.constant 0 : i32
    %c0_i32_0 = arith.constant 0 : i32
    %c0_i32_1 = arith.constant 0 : i32
    return %c0_i32, %c0_i32_0 : i32, i32
  }
  func.func @transform_4(%arg0: i32) -> (i32, i32) {
    %c0_i32 = arith.constant 0 : i32
    %c0_i32_0 = arith.constant 0 : i32
    %c0_i32_1 = arith.constant 0 : i32
    return %c0_i32, %c0_i32_0 : i32, i32
  }
  func.func @transform_5(%arg0: i32) -> (i32, i32) {
    %c0_i32 = arith.constant 0 : i32
    %c0_i32_0 = arith.constant 0 : i32
    return %arg0, %c0_i32 : i32, i32
  }
}

</mosaic_0001>

<llo_original>
// kernel: tpu_custom_call.1
$region0: #{tpu_custom_call.1}
  #allocation0 [shape = 'u32[]', space=smem, size = 0x4, offset = 0x4, fixed_abs, tag = 'smem constant byte address 0x4 - core index']
  #allocation1 [shape = 'u32[144,128]{1,0:T(1,128)}', space=vmem, size = 0x12000, scoped, tag = 'internal scratch']
  %s0 = inlined_call_operand.hbm [shape: f32[16,784], index: 0, kind: input, shape index: {}]
  %s1 = inlined_call_operand.hbm [shape: bf16[784,128], index: 1, kind: input, shape index: {}]
  %s2 = inlined_call_operand.vmem [shape: f32[1,128], index: 2, kind: input, shape index: {}]
  %s3 = inlined_call_operand.hbm [shape: bf16[128,128], index: 3, kind: input, shape index: {}]
  %s4 = inlined_call_operand.vmem [shape: f32[1,128], index: 4, kind: input, shape index: {}]
  %s5 = inlined_call_operand.hbm [shape: bf16[16,128], index: 5, kind: output, shape index: {}]
  %s6 = sld [smem:[#allocation0]]
  $region65: #{tpu_custom_call.1} parent=0
    _
  %s8 = ssub.s32 1, %s6
  %s9 = scalar_select 0, %s8, %s6
  $region1: #{tpu_custom_call.1} parent=0
    #allocation2 [shape = 'u8[57344]{0}', space=vmem, size = 0xe000, scoped, tag = 'input window, operand 0']
    #allocation3 [shape = 's32[2]{0}', space=sflag, size = 0x8, scoped, tag = 'scoped memory for tpu_custom_call.1']
    #allocation4 [shape = 's32[2]{0}', space=sflag, size = 0x8, scoped, tag = 'scoped memory for tpu_custom_call.1']
    #allocation5 [shape = 'u8[200704]{0}', space=vmem, size = 0x31000, scoped, tag = 'input window, operand 1, single buffered']
    #allocation6 [shape = 's32[1]{0}', space=sflag, size = 0x4, scoped, tag = 'scoped memory for tpu_custom_call.1']
    #allocation7 [shape = 'u8[32768]{0}', space=vmem, size = 0x8000, scoped, tag = 'input window, operand 3, single buffered']
    #allocation8 [shape = 'u8[4096]{0}', space=vmem, size = 0x1000, scoped, tag = 'output window, operand 0']
    %10 = vsyncpa [#allocation3], 0
    %s11 = scalar_lea.sflag [#allocation3], 1
    %12 = vsyncpa %s11, 0
    %13 = vsyncpa [#allocation6], 0
    %14 = vsyncpa [#allocation4], 0
    %s15 = scalar_lea.sflag [#allocation4], 1
    %16 = vsyncpa %s15, 0
    loop: start=0, step=1, limit=4
    $region2: #{tpu_custom_call.1} parent=1 // loop_pre_header
      _
    $region3: #{tpu_custom_call.1} parent=1 // loop_header
      %s18 = sphi 0, %s22
      %p19 = scmp.ge.s32.totalorder %s18, 4
      %s28 = sphi 0, %s30
      %s31 = sphi 0, %s28
      %s32 = sphi 0, %s31
      %s48 = sphi 0, %s32
      %s52 = sphi 0, %s52
      %s54 = sphi 0, %s52
      %s55 = sphi 0, %s54
      %s69 = sphi 0, %s55
      %s73 = sphi 0, %s73
      %s75 = sphi 0, %s73
      %s76 = sphi 0, %s75
      %s90 = sphi 0, %s76
      %s94 = sphi 0, %s94
      %s96 = sphi 0, %s94
      %s97 = sphi 0, %s96
      %s111 = sphi 0, %s97
      %s115 = sphi 0, %s115
      %s117 = sphi 0, %s115
      %s118 = sphi 0, %s117
      %s132 = sphi 0, %s118
      %s138 = sphi 0, %s140
      %s141 = sphi 0, %s138
      %s142 = sphi 0, %s141
      %s158 = sphi 0, %s142
    $region4: #{tpu_custom_call.1} parent=1 // loop_header_branch
      %21 = sbr.rel (%p19) target = $region8
    $region5: #{tpu_custom_call.1} parent=1 // loop_body
      %s23 = ssub.s32 %s18, 1
      %s24 = ssub.s32 %s18, 2
      %s25 = sadd.s32 %s18, 1
      %s26 = ssub.s32 %s18, %s25
      %p27 = scmp.eq.s32.totalorder %s26, 0
      %s29 = sadd.s32 %s28, 1
      %s30 = scalar_select %p27, %s28, %s29
      %p33 = pneg %p27
      %p34 = scmp.eq.s32.totalorder %s18, 1
      %p35 = por %p33, %p34
      %p36 = scmp.ne.s32.totalorder %s28, %s31
      %p37 = scmp.eq.s32.totalorder %s18, 0
      %p38 = por %p36, %p37
      %p39 = scmp.ne.s32.totalorder %s28, %s31
      %p40 = scmp.eq.s32.totalorder %s23, 1
      %p41 = por %p39, %p40
      %p42 = scmp.ne.s32.totalorder %s31, %s32
      %p43 = scmp.eq.s32.totalorder %s23, 0
      %p44 = por %p42, %p43
      %p45 = scmp.ne.s32.totalorder %s31, %s32
      %p46 = scmp.eq.s32.totalorder %s24, 1
      %p47 = por %p45, %p46
      %p49 = scmp.ne.s32.totalorder %s32, %s48
      %p50 = scmp.eq.s32.totalorder %s24, 0
      %p51 = por %p49, %p50
      %s53 = sadd.s32 %s52, 1
      %p56 = scmp.eq.s32.totalorder %s18, 1
      %p57 = scmp.ne.s32.totalorder %s52, %s54
      %p58 = scmp.eq.s32.totalorder %s18, 0
      %p59 = por %p57, %p58
      %p60 = scmp.ne.s32.totalorder %s52, %s54
      %p61 = scmp.eq.s32.totalorder %s23, 1
      %p62 = por %p60, %p61
      %p63 = scmp.ne.s32.totalorder %s54, %s55
      %p64 = scmp.eq.s32.totalorder %s23, 0
      %p65 = por %p63, %p64
      %p66 = scmp.ne.s32.totalorder %s54, %s55
      %p67 = scmp.eq.s32.totalorder %s24, 1
      %p68 = por %p66, %p67
      %p70 = scmp.ne.s32.totalorder %s55, %s69
      %p71 = scmp.eq.s32.totalorder %s24, 0
      %p72 = por %p70, %p71
      %s74 = sadd.s32 %s73, 1
      %p77 = scmp.eq.s32.totalorder %s18, 1
      %p78 = scmp.ne.s32.totalorder %s73, %s75
      %p79 = scmp.eq.s32.totalorder %s18, 0
      %p80 = por %p78, %p79
      %p81 = scmp.ne.s32.totalorder %s73, %s75
      %p82 = scmp.eq.s32.totalorder %s23, 1
      %p83 = por %p81, %p82
      %p84 = scmp.ne.s32.totalorder %s75, %s76
      %p85 = scmp.eq.s32.totalorder %s23, 0
      %p86 = por %p84, %p85
      %p87 = scmp.ne.s32.totalorder %s75, %s76
      %p88 = scmp.eq.s32.totalorder %s24, 1
      %p89 = por %p87, %p88
      %p91 = scmp.ne.s32.totalorder %s76, %s90
      %p92 = scmp.eq.s32.totalorder %s24, 0
      %p93 = por %p91, %p92
      %s95 = sadd.s32 %s94, 1
      %p98 = scmp.eq.s32.totalorder %s18, 1
      %p99 = scmp.ne.s32.totalorder %s94, %s96
      %p100 = scmp.eq.s32.totalorder %s18, 0
      %p101 = por %p99, %p100
      %p102 = scmp.ne.s32.totalorder %s94, %s96
      %p103 = scmp.eq.s32.totalorder %s23, 1
      %p104 = por %p102, %p103
      %p105 = scmp.ne.s32.totalorder %s96, %s97
      %p106 = scmp.eq.s32.totalorder %s23, 0
      %p107 = por %p105, %p106
      %p108 = scmp.ne.s32.totalorder %s96, %s97
      %p109 = scmp.eq.s32.totalorder %s24, 1
      %p110 = por %p108, %p109
      %p112 = scmp.ne.s32.totalorder %s97, %s111
      %p113 = scmp.eq.s32.totalorder %s24, 0
      %p114 = por %p112, %p113
      %s116 = sadd.s32 %s115, 1
      %p119 = scmp.eq.s32.totalorder %s18, 1
      %p120 = scmp.ne.s32.totalorder %s115, %s117
      %p121 = scmp.eq.s32.totalorder %s18, 0
      %p122 = por %p120, %p121
      %p123 = scmp.ne.s32.totalorder %s115, %s117
      %p124 = scmp.eq.s32.totalorder %s23, 1
      %p125 = por %p123, %p124
      %p126 = scmp.ne.s32.totalorder %s117, %s118
      %p127 = scmp.eq.s32.totalorder %s23, 0
      %p128 = por %p126, %p127
      %p129 = scmp.ne.s32.totalorder %s117, %s118
      %p130 = scmp.eq.s32.totalorder %s24, 1
      %p131 = por %p129, %p130
      %p133 = scmp.ne.s32.totalorder %s118, %s132
      %p134 = scmp.eq.s32.totalorder %s24, 0
      %p135 = por %p133, %p134
      %s136 = ssub.s32 %s18, %s25
      %p137 = scmp.eq.s32.totalorder %s136, 0
      %s139 = sadd.s32 %s138, 1
      %s140 = scalar_select %p137, %s138, %s139
      %p143 = pneg %p137
      %p144 = scmp.eq.s32.totalorder %s18, 1
      %p145 = por %p143, %p144
      %p146 = scmp.ne.s32.totalorder %s138, %s141
      %p147 = scmp.eq.s32.totalorder %s18, 0
      %p148 = por %p146, %p147
      %p149 = scmp.ne.s32.totalorder %s138, %s141
      %p150 = scmp.eq.s32.totalorder %s23, 1
      %p151 = por %p149, %p150
      %p152 = scmp.ne.s32.totalorder %s141, %s142
      %p153 = scmp.eq.s32.totalorder %s23, 0
      %p154 = por %p152, %p153
      %p155 = scmp.ne.s32.totalorder %s141, %s142
      %p156 = scmp.eq.s32.totalorder %s24, 1
      %p157 = por %p155, %p156
      %p159 = scmp.ne.s32.totalorder %s142, %s158
      %p160 = scmp.eq.s32.totalorder %s24, 0
      %p161 = por %p159, %p160
      %p162 = scmp.le.s32.totalorder 1, %s18
      %p163 = scmp.lt.s32.totalorder %s18, 3
      %p164 = pnand %p162, %p163
      %p165 = pneg %p164
      // Predicated region
      $region9: #{tpu_custom_call.1} parent=5 // pred_check
        _
      $region10: #{tpu_custom_call.1} parent=5 // pred_check_branch
        %167 = sbr.rel (%p164) target = $region12
      $region11: #{tpu_custom_call.1} parent=5 // pred_region
        %s168 = ssub.s32 %s18, 1
        // Predicated region
        $region13: #{tpu_custom_call.1} parent=11 // pred_check
          %p169 = pneg %p65
        $region14: #{tpu_custom_call.1} parent=11 // pred_check_branch
          %171 = sbr.rel (%p169) target = $region16
        $region15: #{tpu_custom_call.1} parent=11 // pred_region
          %s173 = ssub.s32 6272, 6272
          %174 = vsyncadd [#allocation6], %s173
          %s175 = sshll.u32 [#allocation5], 4
          %s176 = int_to_ptr.vmem [resolvable:$true] %s175
          %181 = dma.hbm_to_vmem [thread:$0]  %s1, 6272, %s176, [#allocation6], 64, 64, 4
        $region16: #{tpu_custom_call.1} parent=11 // pred_fallthru
          _
        // Predicated region
        $region17: #{tpu_custom_call.1} parent=11 // pred_check
          %p182 = pneg %p86
        $region18: #{tpu_custom_call.1} parent=11 // pred_check_branch
          %184 = sbr.rel (%p182) target = $region20
        $region19: #{tpu_custom_call.1} parent=11 // pred_region
          _
        $region20: #{tpu_custom_call.1} parent=11 // pred_fallthru
          _
        // Predicated region
        $region21: #{tpu_custom_call.1} parent=11 // pred_check
          %p185 = pneg %p107
        $region22: #{tpu_custom_call.1} parent=11 // pred_check_branch
          %187 = sbr.rel (%p185) target = $region24
        $region23: #{tpu_custom_call.1} parent=11 // pred_region
          %s189 = ssub.s32 1024, 1024
          %190 = vsyncadd [#allocation6], %s189
          %s191 = sshll.u32 [#allocation7], 4
          %s192 = int_to_ptr.vmem [resolvable:$true] %s191
          %197 = dma.hbm_to_vmem [thread:$0]  %s3, 1024, %s192, [#allocation6], 64, 64, 4
        $region24: #{tpu_custom_call.1} parent=11 // pred_fallthru
          _
        // Predicated region
        $region25: #{tpu_custom_call.1} parent=11 // pred_check
          %p198 = pneg %p128
        $region26: #{tpu_custom_call.1} parent=11 // pred_check_branch
          %200 = sbr.rel (%p198) target = $region28
        $region27: #{tpu_custom_call.1} parent=11 // pred_region
          _
        $region28: #{tpu_custom_call.1} parent=11 // pred_fallthru
          _
      $region12: #{tpu_custom_call.1} parent=5 // pred_fallthru
        _
      %p201 = scmp.lt.s32.totalorder %s18, 2
      // Predicated region
      $region29: #{tpu_custom_call.1} parent=5 // pred_check
        %p202 = pneg %p201
      $region30: #{tpu_custom_call.1} parent=5 // pred_check_branch
        %204 = sbr.rel (%p202) target = $region32
      $region31: #{tpu_custom_call.1} parent=5 // pred_region
        // Predicated region
        $region33: #{tpu_custom_call.1} parent=31 // pred_check
          %p205 = pneg %p38
        $region34: #{tpu_custom_call.1} parent=31 // pred_check_branch
          %207 = sbr.rel (%p205) target = $region36
        $region35: #{tpu_custom_call.1} parent=31 // pred_region
          %s208 = sand.u32 %s28, 1
          %s209 = scalar_lea.sflag [#allocation3], %s208
          %s210 = sand.u32 %s28, 1
          %s211 = smul.addr %s210, 56
          %s212 = scalar_lea.vmem [#allocation2], %s211
          %s214 = ssub.s32 896, 896
          %215 = vsyncadd %s209, %s214
          %s216 = smul.addr %s18, 7
          %s217 = smul.addr %s216, 128
          %s218 = scalar_lea.hbm %s0, %s217
          %s220 = sshll.u32 %s212, 4
          %s221 = int_to_ptr.vmem [resolvable:$true] %s220
          %223 = dma.hbm_to_vmem [thread:$0]  %s218, 896, %s221, %s209
        $region36: #{tpu_custom_call.1} parent=31 // pred_fallthru
          _
      $region32: #{tpu_custom_call.1} parent=5 // pred_fallthru
        _
      %p224 = scmp.le.s32.totalorder 1, %s18
      %p225 = scmp.lt.s32.totalorder %s18, 3
      %p226 = pnand %p224, %p225
      %p227 = pneg %p226
      // Predicated region
      $region37: #{tpu_custom_call.1} parent=5 // pred_check
        _
      $region38: #{tpu_custom_call.1} parent=5 // pred_check_branch
        %229 = sbr.rel (%p226) target = $region40
      $region39: #{tpu_custom_call.1} parent=5 // pred_region
        %s230 = ssub.s32 %s18, 1
        %s231 = sand.u32 %s31, 1
        %s232 = scalar_lea.sflag [#allocation3], %s231
        %s233 = sand.u32 %s31, 1
        %s234 = smul.addr %s233, 56
        %s235 = scalar_lea.vmem [#allocation2], %s234
        // Predicated region
        $region41: #{tpu_custom_call.1} parent=39 // pred_check
          %p236 = pneg %p44
        $region42: #{tpu_custom_call.1} parent=39 // pred_check_branch
          %238 = sbr.rel (%p236) target = $region44
        $region43: #{tpu_custom_call.1} parent=39 // pred_region
          %239 = dma.done %s232, 896
        $region44: #{tpu_custom_call.1} parent=39 // pred_fallthru
          _
        // Predicated region
        $region45: #{tpu_custom_call.1} parent=39 // pred_check
          %p240 = pneg %p65
        $region46: #{tpu_custom_call.1} parent=39 // pred_check_branch
          %242 = sbr.rel (%p240) target = $region48
        $region47: #{tpu_custom_call.1} parent=39 // pred_region
          %243 = dma.done [#allocation6], 6272
        $region48: #{tpu_custom_call.1} parent=39 // pred_fallthru
          _
        // Predicated region
        $region49: #{tpu_custom_call.1} parent=39 // pred_check
          %p244 = pneg %p107
        $region50: #{tpu_custom_call.1} parent=39 // pred_check_branch
          %246 = sbr.rel (%p244) target = $region52
        $region51: #{tpu_custom_call.1} parent=39 // pred_region
          %247 = dma.done [#allocation6], 1024
        $region52: #{tpu_custom_call.1} parent=39 // pred_fallthru
          _
        %s248 = sand.u32 %s31, 1
        %s249 = scalar_lea.sflag [#allocation3], %s248
        %s250 = sand.u32 %s31, 1
        %s251 = smul.addr %s250, 56
        %s252 = scalar_lea.vmem [#allocation2], %s251
        %p253 = pneg %p44
        %p254 = pneg %p41
        %p255 = pneg %p65
        %p256 = pneg %p62
        %p257 = pneg %p86
        %p258 = pneg %p83
        %p259 = pneg %p107
        %p260 = pneg %p104
        %p261 = pneg %p128
        %p262 = pneg %p125
        %p263 = pneg %p154
        %p264 = pneg %p151
        %s265 = sand.u32 %s141, 1
        %s266 = scalar_lea.sflag [#allocation4], %s265
        %s267 = sand.u32 %s141, 1
        %s268 = smul.addr %s267, 4
        %s269 = scalar_lea.vmem [#allocation8], %s268
        %v271 = vld [vmem:[%s235] sm:$0xff]
        %v272 = vld [vmem:[%s235 + $0x8] sm:$0xff]
        %v273 = vld [vmem:[%s235 + $0x10] sm:$0xff]
        %v274 = vld [vmem:[%s235 + $0x18] sm:$0xff]
        %v275 = vld [vmem:[%s235 + $0x20] sm:$0xff]
        %v276 = vld [vmem:[%s235 + $0x28] sm:$0xff]
        %v277 = vld [vmem:[%s235 + $0x30] sm:$0xff]
        %v278 = vpack.c.bf16 %v271, %v271
        %v279 = vpack.c.bf16 %v272, %v272
        %v280 = vpack.c.bf16 %v273, %v273
        %v281 = vpack.c.bf16 %v274, %v274
        %v282 = vpack.c.bf16 %v275, %v275
        %v283 = vpack.c.bf16 %v276, %v276
        %v284 = vpack.c.bf16 %v277, %v277
        %v285 = vld [vmem:[#allocation5] sm:$0xf]
        %v286 = vld [vmem:[#allocation5 + $0x4] sm:$0xf]
        %v287 = vld [vmem:[#allocation5 + $0x8] sm:$0xf]
        %v288 = vld [vmem:[#allocation5 + $0xc] sm:$0xf]
        %v289 = vld [vmem:[#allocation5 + $0x10] sm:$0xf]
        %v290 = vld [vmem:[#allocation5 + $0x14] sm:$0xf]
        %v291 = vld [vmem:[#allocation5 + $0x18] sm:$0xf]
        %v292 = vld [vmem:[#allocation5 + $0x1c] sm:$0xf]
        %v293 = vld [vmem:[#allocation5 + $0x20] sm:$0xf]
        %v294 = vld [vmem:[#allocation5 + $0x24] sm:$0xf]
        %v295 = vld [vmem:[#allocation5 + $0x28] sm:$0xf]
        %v296 = vld [vmem:[#allocation5 + $0x2c] sm:$0xf]
        %v297 = vld [vmem:[#allocation5 + $0x30] sm:$0xf]
        %v298 = vld [vmem:[#allocation5 + $0x34] sm:$0xf]
        %v299 = vld [vmem:[#allocation5 + $0x38] sm:$0xf]
        %v300 = vld [vmem:[#allocation5 + $0x3c] sm:$0xf]
        %v301 = vld [vmem:[#allocation5 + $0x40] sm:$0xf]
        %v302 = vld [vmem:[#allocation5 + $0x44] sm:$0xf]
        %v303 = vld [vmem:[#allocation5 + $0x48] sm:$0xf]
        %v304 = vld [vmem:[#allocation5 + $0x4c] sm:$0xf]
        %v305 = vld [vmem:[#allocation5 + $0x50] sm:$0xf]
        %v306 = vld [vmem:[#allocation5 + $0x54] sm:$0xf]
        %v307 = vld [vmem:[#allocation5 + $0x58] sm:$0xf]
        %v308 = vld [vmem:[#allocation5 + $0x5c] sm:$0xf]
        %v309 = vld [vmem:[#allocation5 + $0x60] sm:$0xf]
        %v310 = vld [vmem:[#allocation5 + $0x64] sm:$0xf]
        %v311 = vld [vmem:[#allocation5 + $0x68] sm:$0xf]
        %v312 = vld [vmem:[#allocation5 + $0x6c] sm:$0xf]
        %v313 = vld [vmem:[#allocation5 + $0x70] sm:$0xf]
        %v314 = vld [vmem:[#allocation5 + $0x74] sm:$0xf]
        %v315 = vld [vmem:[#allocation5 + $0x78] sm:$0xf]
        %v316 = vld [vmem:[#allocation5 + $0x7c] sm:$0xf]
        %v317 = vld [vmem:[#allocation5 + $0x80] sm:$0xf]
        %v318 = vld [vmem:[#allocation5 + $0x84] sm:$0xf]
        %v319 = vld [vmem:[#allocation5 + $0x88] sm:$0xf]
        %v320 = vld [vmem:[#allocation5 + $0x8c] sm:$0xf]
        %v321 = vld [vmem:[#allocation5 + $0x90] sm:$0xf]
        %v322 = vld [vmem:[#allocation5 + $0x94] sm:$0xf]
        %v323 = vld [vmem:[#allocation5 + $0x98] sm:$0xf]
        %v324 = vld [vmem:[#allocation5 + $0x9c] sm:$0xf]
        %v325 = vld [vmem:[#allocation5 + $0xa0] sm:$0xf]
        %v326 = vld [vmem:[#allocation5 + $0xa4] sm:$0xf]
        %v327 = vld [vmem:[#allocation5 + $0xa8] sm:$0xf]
        %v328 = vld [vmem:[#allocation5 + $0xac] sm:$0xf]
        %v329 = vld [vmem:[#allocation5 + $0xb0] sm:$0xf]
        %v330 = vld [vmem:[#allocation5 + $0xb4] sm:$0xf]
        %v331 = vld [vmem:[#allocation5 + $0xb8] sm:$0xf]
        %v332 = vld [vmem:[#allocation5 + $0xbc] sm:$0xf]
        %v333 = vld [vmem:[#allocation5 + $0xc0] sm:$0xf]
        %v334 = vld [vmem:[#allocation5 + $0xc4] sm:$0xf]
        %v335 = vld [vmem:[#allocation5 + $0xc8] sm:$0xf]
        %v336 = vld [vmem:[#allocation5 + $0xcc] sm:$0xf]
        %v337 = vld [vmem:[#allocation5 + $0xd0] sm:$0xf]
        %v338 = vld [vmem:[#allocation5 + $0xd4] sm:$0xf]
        %v339 = vld [vmem:[#allocation5 + $0xd8] sm:$0xf]
        %v340 = vld [vmem:[#allocation5 + $0xdc] sm:$0xf]
        %v341 = vld [vmem:[#allocation5 + $0xe0] sm:$0xf]
        %v342 = vld [vmem:[#allocation5 + $0xe4] sm:$0xf]
        %v343 = vld [vmem:[#allocation5 + $0xe8] sm:$0xf]
        %v344 = vld [vmem:[#allocation5 + $0xec] sm:$0xf]
        %v345 = vld [vmem:[#allocation5 + $0xf0] sm:$0xf]
        %v346 = vld [vmem:[#allocation5 + $0xf4] sm:$0xf]
        %v347 = vld [vmem:[#allocation5 + $0xf8] sm:$0xf]
        %v348 = vld [vmem:[#allocation5 + $0xfc] sm:$0xf]
        %v349 = vld [vmem:[#allocation5 + $0x100] sm:$0xf]
        %v350 = vld [vmem:[#allocation5 + $0x104] sm:$0xf]
        %v351 = vld [vmem:[#allocation5 + $0x108] sm:$0xf]
        %v352 = vld [vmem:[#allocation5 + $0x10c] sm:$0xf]
        %v353 = vld [vmem:[#allocation5 + $0x110] sm:$0xf]
        %v354 = vld [vmem:[#allocation5 + $0x114] sm:$0xf]
        %v355 = vld [vmem:[#allocation5 + $0x118] sm:$0xf]
        %v356 = vld [vmem:[#allocation5 + $0x11c] sm:$0xf]
        %v357 = vld [vmem:[#allocation5 + $0x120] sm:$0xf]
        %v358 = vld [vmem:[#allocation5 + $0x124] sm:$0xf]
        %v359 = vld [vmem:[#allocation5 + $0x128] sm:$0xf]
        %v360 = vld [vmem:[#allocation5 + $0x12c] sm:$0xf]
        %v361 = vld [vmem:[#allocation5 + $0x130] sm:$0xf]
        %v362 = vld [vmem:[#allocation5 + $0x134] sm:$0xf]
        %v363 = vld [vmem:[#allocation5 + $0x138] sm:$0xf]
        %v364 = vld [vmem:[#allocation5 + $0x13c] sm:$0xf]
        %v365 = vld [vmem:[#allocation5 + $0x140] sm:$0xf]
        %v366 = vld [vmem:[#allocation5 + $0x144] sm:$0xf]
        %v367 = vld [vmem:[#allocation5 + $0x148] sm:$0xf]
        %v368 = vld [vmem:[#allocation5 + $0x14c] sm:$0xf]
        %v369 = vld [vmem:[#allocation5 + $0x150] sm:$0xf]
        %v370 = vld [vmem:[#allocation5 + $0x154] sm:$0xf]
        %v371 = vld [vmem:[#allocation5 + $0x158] sm:$0xf]
        %v372 = vld [vmem:[#allocation5 + $0x15c] sm:$0xf]
        %v373 = vld [vmem:[#allocation5 + $0x160] sm:$0xf]
        %v374 = vld [vmem:[#allocation5 + $0x164] sm:$0xf]
        %v375 = vld [vmem:[#allocation5 + $0x168] sm:$0xf]
        %v376 = vld [vmem:[#allocation5 + $0x16c] sm:$0xf]
        %v377 = vld [vmem:[#allocation5 + $0x170] sm:$0xf]
        %v378 = vld [vmem:[#allocation5 + $0x174] sm:$0xf]
        %v379 = vld [vmem:[#allocation5 + $0x178] sm:$0xf]
        %v380 = vld [vmem:[#allocation5 + $0x17c] sm:$0xf]
        %v381 = vld [vmem:[#allocation5 + $0x180] sm:$0xf]
        %v382 = vld [vmem:[#allocation5 + $0x184] sm:$0xf]
        %v383 = vld [vmem:[%s2] sm:$0x1]
        %v385 = vlaneseq
        %v386 = vshrl.u32 %v385, 7
        %v387 = vsub.s32 0, %v386
        %v388 = vrot.slane %v383, %v387
        %v488 = vunpack.c.l.b16 %v285
        %v489 = vunpack.c.l.b16 %v286
        %v490 = vunpack.c.l.b16 %v287
        %v491 = vunpack.c.l.b16 %v288
        %v492 = vunpack.c.l.b16 %v289
        %v493 = vunpack.c.l.b16 %v290
        %v494 = vunpack.c.l.b16 %v291
        %v495 = vunpack.c.l.b16 %v292
        %v496 = vunpack.c.l.b16 %v293
        %v497 = vunpack.c.l.b16 %v294
        %v498 = vunpack.c.l.b16 %v295
        %v499 = vunpack.c.l.b16 %v296
        %v500 = vunpack.c.l.b16 %v297
        %v501 = vunpack.c.l.b16 %v298
        %v502 = vunpack.c.l.b16 %v299
        %v503 = vunpack.c.l.b16 %v300
        %v504 = vunpack.c.l.b16 %v301
        %v505 = vunpack.c.l.b16 %v302
        %v506 = vunpack.c.l.b16 %v303
        %v507 = vunpack.c.l.b16 %v304
        %v508 = vunpack.c.l.b16 %v305
        %v509 = vunpack.c.l.b16 %v306
        %v510 = vunpack.c.l.b16 %v307
        %v511 = vunpack.c.l.b16 %v308
        %v512 = vunpack.c.l.b16 %v309
        %v513 = vunpack.c.l.b16 %v310
        %v514 = vunpack.c.l.b16 %v311
        %v515 = vunpack.c.l.b16 %v312
        %v516 = vunpack.c.l.b16 %v313
        %v517 = vunpack.c.l.b16 %v314
        %v518 = vunpack.c.l.b16 %v315
        %v519 = vunpack.c.l.b16 %v316
        %v520 = vunpack.c.l.b16 %v317
        %v521 = vunpack.c.l.b16 %v318
        %v522 = vunpack.c.l.b16 %v319
        %v523 = vunpack.c.l.b16 %v320
        %v524 = vunpack.c.l.b16 %v321
        %v525 = vunpack.c.l.b16 %v322
        %v526 = vunpack.c.l.b16 %v323
        %v527 = vunpack.c.l.b16 %v324
        %v528 = vunpack.c.l.b16 %v325
        %v529 = vunpack.c.l.b16 %v326
        %v530 = vunpack.c.l.b16 %v327
        %v531 = vunpack.c.l.b16 %v328
        %v532 = vunpack.c.l.b16 %v329
        %v533 = vunpack.c.l.b16 %v330
        %v534 = vunpack.c.l.b16 %v331
        %v535 = vunpack.c.l.b16 %v332
        %v536 = vunpack.c.l.b16 %v333
        %v537 = vunpack.c.l.b16 %v334
        %v538 = vunpack.c.l.b16 %v335
        %v539 = vunpack.c.l.b16 %v336
        %v540 = vunpack.c.l.b16 %v337
        %v541 = vunpack.c.l.b16 %v338
        %v542 = vunpack.c.l.b16 %v339
        %v543 = vunpack.c.l.b16 %v340
        %v544 = vunpack.c.l.b16 %v341
        %v545 = vunpack.c.l.b16 %v342
        %v546 = vunpack.c.l.b16 %v343
        %v547 = vunpack.c.l.b16 %v344
        %v548 = vunpack.c.l.b16 %v345
        %v549 = vunpack.c.l.b16 %v346
        %v550 = vunpack.c.l.b16 %v347
        %v551 = vunpack.c.l.b16 %v348
        %v552 = vunpack.c.l.b16 %v349
        %v553 = vunpack.c.l.b16 %v350
        %v554 = vunpack.c.l.b16 %v351
        %v555 = vunpack.c.l.b16 %v352
        %v556 = vunpack.c.l.b16 %v353
        %v557 = vunpack.c.l.b16 %v354
        %v558 = vunpack.c.l.b16 %v355
        %v559 = vunpack.c.l.b16 %v356
        %v560 = vunpack.c.l.b16 %v357
        %v561 = vunpack.c.l.b16 %v358
        %v562 = vunpack.c.l.b16 %v359
        %v563 = vunpack.c.l.b16 %v360
        %v564 = vunpack.c.l.b16 %v361
        %v565 = vunpack.c.l.b16 %v362
        %v566 = vunpack.c.l.b16 %v363
        %v567 = vunpack.c.l.b16 %v364
        %v568 = vunpack.c.l.b16 %v365
        %v569 = vunpack.c.l.b16 %v366
        %v570 = vunpack.c.l.b16 %v367
        %v571 = vunpack.c.l.b16 %v368
        %v572 = vunpack.c.l.b16 %v369
        %v573 = vunpack.c.l.b16 %v370
        %v574 = vunpack.c.l.b16 %v371
        %v575 = vunpack.c.l.b16 %v372
        %v576 = vunpack.c.l.b16 %v373
        %v577 = vunpack.c.l.b16 %v374
        %v578 = vunpack.c.l.b16 %v375
        %v579 = vunpack.c.l.b16 %v376
        %v580 = vunpack.c.l.b16 %v377
        %v581 = vunpack.c.l.b16 %v378
        %v582 = vunpack.c.l.b16 %v379
        %v583 = vunpack.c.l.b16 %v380
        %v584 = vunpack.c.l.b16 %v381
        %v585 = vunpack.c.l.b16 %v382
        %v586 = vpack.c.b16 %v489, %v488
        %v587 = vpack.c.b16 %v491, %v490
        %v588 = vpack.c.b16 %v493, %v492
        %v589 = vpack.c.b16 %v495, %v494
        %v590 = vpack.c.b16 %v497, %v496
        %v591 = vpack.c.b16 %v499, %v498
        %v592 = vpack.c.b16 %v501, %v500
        %v593 = vpack.c.b16 %v503, %v502
        %v594 = vpack.c.b16 %v505, %v504
        %v595 = vpack.c.b16 %v507, %v506
        %v596 = vpack.c.b16 %v509, %v508
        %v597 = vpack.c.b16 %v511, %v510
        %v598 = vpack.c.b16 %v513, %v512
        %v599 = vpack.c.b16 %v515, %v514
        %v600 = vpack.c.b16 %v517, %v516
        %v601 = vpack.c.b16 %v519, %v518
        %v602 = vpack.c.b16 %v521, %v520
        %v603 = vpack.c.b16 %v523, %v522
        %v604 = vpack.c.b16 %v525, %v524
        %v605 = vpack.c.b16 %v527, %v526
        %v606 = vpack.c.b16 %v529, %v528
        %v607 = vpack.c.b16 %v531, %v530
        %v608 = vpack.c.b16 %v533, %v532
        %v609 = vpack.c.b16 %v535, %v534
        %v610 = vpack.c.b16 %v537, %v536
        %v611 = vpack.c.b16 %v539, %v538
        %v612 = vpack.c.b16 %v541, %v540
        %v613 = vpack.c.b16 %v543, %v542
        %v614 = vpack.c.b16 %v545, %v544
        %v615 = vpack.c.b16 %v547, %v546
        %v616 = vpack.c.b16 %v549, %v548
        %v617 = vpack.c.b16 %v551, %v550
        %v618 = vpack.c.b16 %v553, %v552
        %v619 = vpack.c.b16 %v555, %v554
        %v620 = vpack.c.b16 %v557, %v556
        %v621 = vpack.c.b16 %v559, %v558
        %v622 = vpack.c.b16 %v561, %v560
        %v623 = vpack.c.b16 %v563, %v562
        %v624 = vpack.c.b16 %v565, %v564
        %v625 = vpack.c.b16 %v567, %v566
        %v626 = vpack.c.b16 %v569, %v568
        %v627 = vpack.c.b16 %v571, %v570
        %v628 = vpack.c.b16 %v573, %v572
        %v629 = vpack.c.b16 %v575, %v574
        %v630 = vpack.c.b16 %v577, %v576
        %v631 = vpack.c.b16 %v579, %v578
        %v632 = vpack.c.b16 %v581, %v580
        %v633 = vpack.c.b16 %v583, %v582
        %v634 = vpack.c.b16 %v585, %v584
        %vm684 = vcmask 130048
        %v686 = vsel %vm684, %v284, 0
        %688 = vmatprep.subr.bf16.mxu0 0
        %689 = vmatpush1.bf16.msra.mxu0 %v586
        %690 = vmatprep.subr.bf16.mxu0 0
        %691 = vmatpush1.bf16.msra.mxu0 %v587
        %692 = vmatprep.subr.bf16.mxu0 0
        %693 = vmatpush1.bf16.msra.mxu0 %v588
        %694 = vmatprep.subr.bf16.mxu0 0
        %695 = vmatpush1.bf16.msra.mxu0 %v589
        %696 = vmatprep.subr.bf16.mxu0 0
        %697 = vmatpush1.bf16.msra.mxu0 %v590
        %698 = vmatprep.subr.bf16.mxu0 0
        %699 = vmatpush1.bf16.msra.mxu0 %v591
        %700 = vmatprep.subr.bf16.mxu0 0
        %701 = vmatpush1.bf16.msra.mxu0 %v592
        %702 = vmatprep.subr.bf16.mxu0 0
        %703 = vmatpush1.bf16.msra.mxu0 %v593
        %704 = vmatprep.subr.bf16.mxu0 0
        %705 = vmatpush1.bf16.msra.mxu0 %v594
        %706 = vmatprep.subr.bf16.mxu0 0
        %707 = vmatpush1.bf16.msra.mxu0 %v595
        %708 = vmatprep.subr.bf16.mxu0 0
        %709 = vmatpush1.bf16.msra.mxu0 %v596
        %710 = vmatprep.subr.bf16.mxu0 0
        %711 = vmatpush1.bf16.msra.mxu0 %v597
        %712 = vmatprep.subr.bf16.mxu0 0
        %713 = vmatpush1.bf16.msra.mxu0 %v598
        %714 = vmatprep.subr.bf16.mxu0 0
        %715 = vmatpush1.bf16.msra.mxu0 %v599
        %716 = vmatprep.subr.bf16.mxu0 0
        %717 = vmatpush1.bf16.msra.mxu0 %v600
        %718 = vmatprep.subr.bf16.mxu0 0
        %719 = vmatpush1.bf16.msra.mxu0 %v601
        %720 = vmatprep.mubr.bf16.mxu0 %v279
        %721 = vmatmul.mubr.bf16.gmra.mrb[0].mxu0 %v278
        %v722 = vpop.f32.mrb[0].mxu0
        %v723 = vadd.f32 %v388, %v722
        %v724 = vpop.f32.mrb[0].mxu0
        %v725 = vpop.f32.mrb[0].mxu0
        %v726 = vpop.f32.mrb[0].mxu0
        %727 = vdwg.mxu0
        %728 = vmatprep.subr.bf16.mxu0 0
        %729 = vmatpush1.bf16.msra.mxu0 %v602
        %730 = vmatprep.subr.bf16.mxu0 0
        %731 = vmatpush1.bf16.msra.mxu0 %v603
        %732 = vmatprep.subr.bf16.mxu0 0
        %733 = vmatpush1.bf16.msra.mxu0 %v604
        %734 = vmatprep.subr.bf16.mxu0 0
        %735 = vmatpush1.bf16.msra.mxu0 %v605
        %736 = vmatprep.subr.bf16.mxu0 0
        %737 = vmatpush1.bf16.msra.mxu0 %v606
        %738 = vmatprep.subr.bf16.mxu0 0
        %739 = vmatpush1.bf16.msra.mxu0 %v607
        %740 = vmatprep.subr.bf16.mxu0 0
        %741 = vmatpush1.bf16.msra.mxu0 %v608
        %742 = vmatprep.subr.bf16.mxu0 0
        %743 = vmatpush1.bf16.msra.mxu0 %v609
        %744 = vmatprep.subr.bf16.mxu0 0
        %745 = vmatpush1.bf16.msra.mxu0 %v610
        %746 = vmatprep.subr.bf16.mxu0 0
        %747 = vmatpush1.bf16.msra.mxu0 %v611
        %748 = vmatprep.subr.bf16.mxu0 0
        %749 = vmatpush1.bf16.msra.mxu0 %v612
        %750 = vmatprep.subr.bf16.mxu0 0
        %751 = vmatpush1.bf16.msra.mxu0 %v613
        %752 = vmatprep.subr.bf16.mxu0 0
        %753 = vmatpush1.bf16.msra.mxu0 %v614
        %754 = vmatprep.subr.bf16.mxu0 0
        %755 = vmatpush1.bf16.msra.mxu0 %v615
        %756 = vmatprep.subr.bf16.mxu0 0
        %757 = vmatpush1.bf16.msra.mxu0 %v616
        %758 = vmatprep.subr.bf16.mxu0 0
        %759 = vmatpush1.bf16.msra.mxu0 %v617
        %760 = vmatprep.mubr.bf16.mxu0 %v281
        %761 = vmatmul.mubr.bf16.gmra.mrb[0].mxu0 %v280
        %v762 = vpop.f32.mrb[0].mxu0
        %v763 = vadd.f32 %v723, %v762
        %v764 = vpop.f32.mrb[0].mxu0
        %v765 = vpop.f32.mrb[0].mxu0
        %v766 = vpop.f32.mrb[0].mxu0
        %767 = vdwg.mxu0
        %768 = vmatprep.subr.bf16.mxu0 0
        %769 = vmatpush1.bf16.msra.mxu0 %v618
        %770 = vmatprep.subr.bf16.mxu0 0
        %771 = vmatpush1.bf16.msra.mxu0 %v619
        %772 = vmatprep.subr.bf16.mxu0 0
        %773 = vmatpush1.bf16.msra.mxu0 %v620
        %774 = vmatprep.subr.bf16.mxu0 0
        %775 = vmatpush1.bf16.msra.mxu0 %v621
        %776 = vmatprep.subr.bf16.mxu0 0
        %777 = vmatpush1.bf16.msra.mxu0 %v622
        %778 = vmatprep.subr.bf16.mxu0 0
        %779 = vmatpush1.bf16.msra.mxu0 %v623
        %780 = vmatprep.subr.bf16.mxu0 0
        %781 = vmatpush1.bf16.msra.mxu0 %v624
        %782 = vmatprep.subr.bf16.mxu0 0
        %783 = vmatpush1.bf16.msra.mxu0 %v625
        %784 = vmatprep.subr.bf16.mxu0 0
        %785 = vmatpush1.bf16.msra.mxu0 %v626
        %786 = vmatprep.subr.bf16.mxu0 0
        %787 = vmatpush1.bf16.msra.mxu0 %v627
        %788 = vmatprep.subr.bf16.mxu0 0
        %789 = vmatpush1.bf16.msra.mxu0 %v628
        %790 = vmatprep.subr.bf16.mxu0 0
        %791 = vmatpush1.bf16.msra.mxu0 %v629
        %792 = vmatprep.subr.bf16.mxu0 0
        %793 = vmatpush1.bf16.msra.mxu0 %v630
        %794 = vmatprep.subr.bf16.mxu0 0
        %795 = vmatpush1.bf16.msra.mxu0 %v631
        %796 = vmatprep.subr.bf16.mxu0 0
        %797 = vmatpush1.bf16.msra.mxu0 %v632
        %798 = vmatprep.subr.bf16.mxu0 0
        %799 = vmatpush1.bf16.msra.mxu0 %v633
        %800 = vmatprep.mubr.bf16.mxu0 %v283
        %801 = vmatmul.mubr.bf16.gmra.mrb[0].mxu0 %v282
        %v802 = vpop.f32.mrb[0].mxu0
        %v803 = vadd.f32 %v763, %v802
        %v804 = vpop.f32.mrb[0].mxu0
        %v805 = vpop.f32.mrb[0].mxu0
        %v806 = vpop.f32.mrb[0].mxu0
        %807 = vdwg.mxu0
        %808 = vmatprep.subr.bf16.mxu0 0
        %809 = vmatpush1.bf16.msra.mxu0 %v634
        %810 = vmatprep.subr.bf16.mxu0 0
        %811 = vmatpush1.bf16.msra.mxu0 0
        %812 = vmatprep.subr.bf16.mxu0 0
        %813 = vmatpush1.bf16.msra.mxu0 0
        %814 = vmatprep.subr.bf16.mxu0 0
        %815 = vmatpush1.bf16.msra.mxu0 0
        %816 = vmatprep.subr.bf16.mxu0 0
        %817 = vmatpush1.bf16.msra.mxu0 0
        %818 = vmatprep.subr.bf16.mxu0 0
        %819 = vmatpush1.bf16.msra.mxu0 0
        %820 = vmatprep.subr.bf16.mxu0 0
        %821 = vmatpush1.bf16.msra.mxu0 0
        %822 = vmatprep.subr.bf16.mxu0 0
        %823 = vmatpush1.bf16.msra.mxu0 0
        %824 = vmatprep.subr.bf16.mxu0 0
        %825 = vmatpush1.bf16.msra.mxu0 0
        %826 = vmatprep.subr.bf16.mxu0 0
        %827 = vmatpush1.bf16.msra.mxu0 0
        %828 = vmatprep.subr.bf16.mxu0 0
        %829 = vmatpush1.bf16.msra.mxu0 0
        %830 = vmatprep.subr.bf16.mxu0 0
        %831 = vmatpush1.bf16.msra.mxu0 0
        %832 = vmatprep.subr.bf16.mxu0 0
        %833 = vmatpush1.bf16.msra.mxu0 0
        %834 = vmatprep.subr.bf16.mxu0 0
        %835 = vmatpush1.bf16.msra.mxu0 0
        %836 = vmatprep.subr.bf16.mxu0 0
        %837 = vmatpush1.bf16.msra.mxu0 0
        %838 = vmatprep.subr.bf16.mxu0 0
        %839 = vmatpush1.bf16.msra.mxu0 0
        %840 = vmatprep.mubr.bf16.mxu0 0
        %841 = vmatmul.mubr.bf16.gmra.mrb[0].mxu0 %v686
        %v842 = vpop.f32.mrb[0].mxu0
        %v843 = vadd.f32 %v803, %v842
        %v844 = vpop.f32.mrb[0].mxu0
        %v845 = vpop.f32.mrb[0].mxu0
        %v846 = vpop.f32.mrb[0].mxu0
        %847 = vdwg.mxu0
        %v848 = vmax.f32 %v843, 0.0
        %v849 = vpack.c.bf16 %v848, %v848
        %v850 = vld [vmem:[#allocation7] sm:$0xf]
        %v851 = vld [vmem:[#allocation7 + $0x4] sm:$0xf]
        %v852 = vld [vmem:[#allocation7 + $0x8] sm:$0xf]
        %v853 = vld [vmem:[#allocation7 + $0xc] sm:$0xf]
        %v854 = vld [vmem:[#allocation7 + $0x10] sm:$0xf]
        %v855 = vld [vmem:[#allocation7 + $0x14] sm:$0xf]
        %v856 = vld [vmem:[#allocation7 + $0x18] sm:$0xf]
        %v857 = vld [vmem:[#allocation7 + $0x1c] sm:$0xf]
        %v858 = vld [vmem:[#allocation7 + $0x20] sm:$0xf]
        %v859 = vld [vmem:[#allocation7 + $0x24] sm:$0xf]
        %v860 = vld [vmem:[#allocation7 + $0x28] sm:$0xf]
        %v861 = vld [vmem:[#allocation7 + $0x2c] sm:$0xf]
        %v862 = vld [vmem:[#allocation7 + $0x30] sm:$0xf]
        %v863 = vld [vmem:[#allocation7 + $0x34] sm:$0xf]
        %v864 = vld [vmem:[#allocation7 + $0x38] sm:$0xf]
        %v865 = vld [vmem:[#allocation7 + $0x3c] sm:$0xf]
        %v866 = vld [vmem:[%s4] sm:$0x1]
        %v868 = vlaneseq
        %v869 = vshrl.u32 %v868, 7
        %v870 = vsub.s32 0, %v869
        %v871 = vrot.slane %v866, %v870
        %v889 = vunpack.c.l.b16 %v850
        %v890 = vunpack.c.l.b16 %v851
        %v891 = vunpack.c.l.b16 %v852
        %v892 = vunpack.c.l.b16 %v853
        %v893 = vunpack.c.l.b16 %v854
        %v894 = vunpack.c.l.b16 %v855
        %v895 = vunpack.c.l.b16 %v856
        %v896 = vunpack.c.l.b16 %v857
        %v897 = vunpack.c.l.b16 %v858
        %v898 = vunpack.c.l.b16 %v859
        %v899 = vunpack.c.l.b16 %v860
        %v900 = vunpack.c.l.b16 %v861
        %v901 = vunpack.c.l.b16 %v862
        %v902 = vunpack.c.l.b16 %v863
        %v903 = vunpack.c.l.b16 %v864
        %v904 = vunpack.c.l.b16 %v865
        %v905 = vpack.c.b16 %v890, %v889
        %v906 = vpack.c.b16 %v892, %v891
        %v907 = vpack.c.b16 %v894, %v893
        %v908 = vpack.c.b16 %v896, %v895
        %v909 = vpack.c.b16 %v898, %v897
        %v910 = vpack.c.b16 %v900, %v899
        %v911 = vpack.c.b16 %v902, %v901
        %v912 = vpack.c.b16 %v904, %v903
        %921 = vmatprep.subr.bf16.mxu0 0
        %922 = vmatpush1.bf16.msra.mxu0 %v905
        %923 = vmatprep.subr.bf16.mxu0 0
        %924 = vmatpush1.bf16.msra.mxu0 %v906
        %925 = vmatprep.subr.bf16.mxu0 0
        %926 = vmatpush1.bf16.msra.mxu0 %v907
        %927 = vmatprep.subr.bf16.mxu0 0
        %928 = vmatpush1.bf16.msra.mxu0 %v908
        %929 = vmatprep.subr.bf16.mxu0 0
        %930 = vmatpush1.bf16.msra.mxu0 %v909
        %931 = vmatprep.subr.bf16.mxu0 0
        %932 = vmatpush1.bf16.msra.mxu0 %v910
        %933 = vmatprep.subr.bf16.mxu0 0
        %934 = vmatpush1.bf16.msra.mxu0 %v911
        %935 = vmatprep.subr.bf16.mxu0 0
        %936 = vmatpush1.bf16.msra.mxu0 %v912
        %937 = vmatprep.subr.bf16.mxu0 0
        %938 = vmatpush1.bf16.msra.mxu0 0
        %939 = vmatprep.subr.bf16.mxu0 0
        %940 = vmatpush1.bf16.msra.mxu0 0
        %941 = vmatprep.subr.bf16.mxu0 0
        %942 = vmatpush1.bf16.msra.mxu0 0
        %943 = vmatprep.subr.bf16.mxu0 0
        %944 = vmatpush1.bf16.msra.mxu0 0
        %945 = vmatprep.subr.bf16.mxu0 0
        %946 = vmatpush1.bf16.msra.mxu0 0
        %947 = vmatprep.subr.bf16.mxu0 0
        %948 = vmatpush1.bf16.msra.mxu0 0
        %949 = vmatprep.subr.bf16.mxu0 0
        %950 = vmatpush1.bf16.msra.mxu0 0
        %951 = vmatprep.subr.bf16.mxu0 0
        %952 = vmatpush1.bf16.msra.mxu0 0
        %953 = vmatprep.mubr.bf16.mxu0 0
        %954 = vmatmul.mubr.bf16.gmra.mrb[0].mxu0 %v849
        %v955 = vpop.f32.mrb[0].mxu0
        %v956 = vadd.f32 %v871, %v955
        %v957 = vpop.f32.mrb[0].mxu0
        %v958 = vpop.f32.mrb[0].mxu0
        %v959 = vpop.f32.mrb[0].mxu0
        %960 = vdwg.mxu0
        %v961 = vpack.c.bf16 %v956, %v956
        %962 = vst [vmem:[%s269] sm:$0xf] %v961
        %s963 = sand.u32 %s141, 1
        %s964 = scalar_lea.sflag [#allocation4], %s963
        %s965 = sand.u32 %s141, 1
        %s966 = smul.addr %s965, 4
        %s967 = scalar_lea.vmem [#allocation8], %s966
        // Predicated region
        $region53: #{tpu_custom_call.1} parent=39 // pred_check
          %p968 = pneg %p151
        $region54: #{tpu_custom_call.1} parent=39 // pred_check_branch
          %970 = sbr.rel (%p968) target = $region56
        $region55: #{tpu_custom_call.1} parent=39 // pred_region
          %s972 = ssub.s32 64, 64
          %973 = vsyncadd %s964, %s972
          %s974 = smul.addr %s23, 64
          %s975 = scalar_lea.hbm %s5, %s974
          %s977 = sshll.u32 %s967, 4
          %s978 = int_to_ptr.vmem [resolvable:$true] %s977
          %980 = dma.vmem_to_hbm [thread:$0]  %s978, 64, %s975, %s964
        $region56: #{tpu_custom_call.1} parent=39 // pred_fallthru
          _
      $region40: #{tpu_custom_call.1} parent=5 // pred_fallthru
        _
      %p981 = scmp.le.s32.totalorder 2, %s18
      // Predicated region
      $region57: #{tpu_custom_call.1} parent=5 // pred_check
        %p982 = pneg %p981
      $region58: #{tpu_custom_call.1} parent=5 // pred_check_branch
        %984 = sbr.rel (%p982) target = $region60
      $region59: #{tpu_custom_call.1} parent=5 // pred_region
        %s985 = ssub.s32 %s18, 2
        // Predicated region
        $region61: #{tpu_custom_call.1} parent=59 // pred_check
          %p986 = pneg %p157
        $region62: #{tpu_custom_call.1} parent=59 // pred_check_branch
          %988 = sbr.rel (%p986) target = $region64
        $region63: #{tpu_custom_call.1} parent=59 // pred_region
          %s989 = sand.u32 %s142, 1
          %s990 = scalar_lea.sflag [#allocation4], %s989
          %s991 = sand.u32 %s142, 1
          %s992 = smul.addr %s991, 4
          %s993 = scalar_lea.vmem [#allocation8], %s992
          %994 = dma.done %s990, 64
        $region64: #{tpu_custom_call.1} parent=59 // pred_fallthru
          _
      $region60: #{tpu_custom_call.1} parent=5 // pred_fallthru
        _
    $region6: #{tpu_custom_call.1} parent=1 // loop_footer
      %s22 = sadd.s32 1, %s18
    $region7: #{tpu_custom_call.1} parent=1 // loop_footer_branch
      %17 = sbr.rel target = $region3
    $region8: #{tpu_custom_call.1} parent=1 // loop_exit
      _
    %995 = vsyncpa [#allocation3], 1
    %s996 = scalar_lea.sflag [#allocation3], 1
    %997 = vsyncpa %s996, 1
    %998 = vsyncpa [#allocation6], 1
    %999 = vsyncpa [#allocation4], 1
    %s1000 = scalar_lea.sflag [#allocation4], 1
    %1001 = vsyncpa %s1000, 1

</llo_original>
